<compile_context>
chip_gen: v7x
topology: tpu7x:2x2x1
jax: 0.10.0
libtpu: 0.0.40
codegen_flags: <defaults>
</compile_context>

<pallas_src>
import jax
import jax.numpy as jnp
from jax.experimental import pallas as pl
from jax.experimental.pallas import tpu as pltpu

# TODO(synk): min_value / max_value are undefined globals in the reference
# PyTorch module; 0.0 / 6.0 (ReLU6-style clamp) are assumed here.
MIN_VALUE = 0.0
MAX_VALUE = 6.0

CIN, COUT, K, STRIDE = 9, 11, 5, 5


def _convt_clamp_kernel(w_ref, x_ref, o_ref):
    # (Cout*K*K, Cin+1) @ (Cin+1, N*H*W) on the MXU (bias folded into the last
    # contraction row), then clamp on the VPU.  Output last dim is a multiple
    # of 128 -> unmasked stores.
    acc = jnp.dot(w_ref[...], x_ref[...], preferred_element_type=jnp.float32)
    acc = jnp.maximum(acc, MIN_VALUE)   # clamp_min
    acc = jnp.minimum(acc, MAX_VALUE)   # clamp_max
    o_ref[...] = acc.astype(o_ref.dtype)


def prepare_params(weight, bias):
    """One-time parameter prep (hoisted out of the per-call path).

    weight: (Cin, Cout, K, K) float32 (PyTorch ConvTranspose2d layout)
    bias:   (Cout,) float32
    returns w_aug: (Cout*K*K, Cin+1) float32 with bias as the last column.
    """
    w_flat = weight.reshape(CIN, COUT * K * K)                    # (9, 275)
    w_t = w_flat.T                                                # (275, 9)
    b_col = jnp.repeat(bias, K * K).reshape(COUT * K * K, 1)      # (275, 1)
    return jnp.concatenate([w_t, b_col], axis=1)                  # (275, 10)


@jax.jit
def conv_transpose_clamp(x_nchw, w_aug):
    """x_nchw: (N, Cin, H, W) float32, w_aug: (Cout*K*K, Cin+1) float32
    returns (N, Cout, H*K, W*K) float32
    """
    N, Cin, H, W = x_nchw.shape
    assert Cin == CIN
    M = N * H * W
    NN = COUT * K * K

    # Fused (same jit) input glue: (N,Cin,H,W) -> (Cin, N*H*W), append ones row
    # so the matmul also applies the bias.
    x_flat = jnp.moveaxis(x_nchw, 1, 0).reshape(Cin, M)           # (9, M)
    x_aug = jnp.concatenate(
        [x_flat, jnp.ones((1, M), dtype=x_flat.dtype)], axis=0)   # (10, M)

    out_t = pl.pallas_call(
        _convt_clamp_kernel,
        out_shape=jax.ShapeDtypeStruct((NN, M), jnp.float32),
        in_specs=[
            pl.BlockSpec(memory_space=pltpu.MemorySpace.VMEM),    # w_aug (275, 10)
            pl.BlockSpec(memory_space=pltpu.MemorySpace.VMEM),    # x_aug (10, 256)
        ],
        out_specs=pl.BlockSpec(memory_space=pltpu.MemorySpace.VMEM),  # (275, 256)
    )(w_aug, x_aug)

    # Fused (same jit) output glue: scatter the non-overlapping KxK patches
    # back to NCHW. out_t[co*K*K + kh*K + kw, n*H*W + h*W + w].
    out = out_t.reshape(COUT, K, K, N, H, W)
    out = jnp.transpose(out, (3, 0, 4, 1, 5, 2))                  # (N, Cout, H, K, W, K)
    return out.reshape(N, COUT, H * K, W * K)


if __name__ == "__main__":
    key = jax.random.PRNGKey(0)
    kx, kw, kb = jax.random.split(key, 3)

    # Input matching the reference module: (1, 9, 16, 16)
    x1 = jax.random.normal(kx, (1, 9, 16, 16), dtype=jnp.float32)

    # Deterministic parameter init (PyTorch-style uniform bound 1/sqrt(fan_in*K*K))
    bound = 1.0 / (CIN * K * K) ** 0.5
    weight = jax.random.uniform(kw, (CIN, COUT, K, K), jnp.float32, -bound, bound)
    bias = jax.random.uniform(kb, (COUT,), jnp.float32, -bound, bound)

    # Parameter-only reformatting done once, outside the forward path.
    w_aug = prepare_params(weight, bias)

    out = conv_transpose_clamp(x1, w_aug)
    jax.block_until_ready(out)

    assert out.shape == (1, COUT, 80, 80), out.shape

    # Pure-JAX reference (stride == kernel => independent patches).
    ref = jnp.einsum("nchw,copq->nohpwq", x1, weight)
    ref = ref.reshape(1, COUT, 16 * K, 16 * K) + bias[None, :, None, None]
    ref = jnp.clip(ref, MIN_VALUE, MAX_VALUE)
    assert bool(jnp.allclose(out, ref, atol=1e-4, rtol=1e-4))
    assert bool(jnp.all(out >= MIN_VALUE)) and bool(jnp.all(out <= MAX_VALUE))

    print("KERNEL_OK")
</pallas_src>

<mosaic_0001>
module attributes {stable_mosaic.version = 11 : i64} {
  func.func @_convt_clamp_kernel(%arg0: memref<275x10xf32, #tpu.memory_space<vmem>>, %arg1: memref<10x256xf32, #tpu.memory_space<vmem>>, %arg2: memref<275x256xf32, #tpu.memory_space<vmem>>) attributes {dimension_semantics = [], scalar_prefetch = 0 : i64, scratch_operands = 0 : i64, tpu.core_type = #tpu.core_type<tc>} {
    %c0 = arith.constant 0 : index
    %c0_0 = arith.constant 0 : index
    %0 = vector.load %arg0[%c0, %c0_0] : memref<275x10xf32, #tpu.memory_space<vmem>>, vector<275x10xf32>
    %c0_1 = arith.constant 0 : index
    %c0_2 = arith.constant 0 : index
    %1 = vector.load %arg1[%c0_1, %c0_2] : memref<10x256xf32, #tpu.memory_space<vmem>>, vector<10x256xf32>
    %cst = arith.constant dense<0.000000e+00> : vector<275x256xf32>
    %2 = tpu.matmul %0, %1, %cst {dimension_numbers = #tpu.dot_dimension_numbers<[1], [0], [0], [1], [0, 0, 1, 1], [], []>} : vector<275x10xf32>, vector<10x256xf32>, vector<275x256xf32> -> vector<275x256xf32>
    %cst_3 = arith.constant 0.000000e+00 : f32
    %3 = vector.broadcast %cst_3 : f32 to vector<275x256xf32>
    %4 = arith.maximumf %2, %3 : vector<275x256xf32>
    %cst_4 = arith.constant 6.000000e+00 : f32
    %5 = vector.broadcast %cst_4 : f32 to vector<275x256xf32>
    %6 = arith.minimumf %4, %5 : vector<275x256xf32>
    %c0_5 = arith.constant 0 : index
    %c0_6 = arith.constant 0 : index
    %7 = vector.load %arg2[%c0_5, %c0_6] : memref<275x256xf32, #tpu.memory_space<vmem>>, vector<275x256xf32>
    tpu.vector_store %arg2[%c0_5, %c0_6], %6 {strides = array<i32>} : memref<275x256xf32, #tpu.memory_space<vmem>>, vector<275x256xf32>,
    return
  }
}

</mosaic_0001>

<llo_original>
// kernel: conv_transpose_clamp.1
$region0: #{conv_transpose_clamp.1}
  #allocation0 [shape = 'u32[]', space=smem, size = 0x4, offset = 0x4, fixed_abs, tag = 'smem constant byte address 0x4 - core index']
  #allocation1 [shape = 'u32[144,128]{1,0:T(1,128)}', space=vmem, size = 0x12000, scoped, tag = 'internal scratch']
  %s0 = inlined_call_operand.vmem [shape: f32[275,10], index: 0, kind: input, shape index: {}]
  %s1 = inlined_call_operand.vmem [shape: f32[10,256], index: 1, kind: input, shape index: {}]
  %s2 = inlined_call_operand.vmem [shape: f32[275,256], index: 2, kind: output, shape index: {}]
  %s3 = sld [smem:[#allocation0]]
  $region18: #{conv_transpose_clamp.1} parent=0
    _
  %s5 = ssub.s32 1, %s3
  %s6 = scalar_select 0, %s5, %s3
  // Predicated region
  $region2: #{conv_transpose_clamp.1} parent=0 // pred_check
    _
  $region3: #{conv_transpose_clamp.1} parent=0 // pred_check_branch
    %8 = sbr.rel (0) target = $region5
  $region4: #{conv_transpose_clamp.1} parent=0 // pred_region
    _
  $region5: #{conv_transpose_clamp.1} parent=0 // pred_fallthru
    _
  // Predicated region
  $region6: #{conv_transpose_clamp.1} parent=0 // pred_check
    _
  $region7: #{conv_transpose_clamp.1} parent=0 // pred_check_branch
    %10 = sbr.rel (0) target = $region9
  $region8: #{conv_transpose_clamp.1} parent=0 // pred_region
    _
  $region9: #{conv_transpose_clamp.1} parent=0 // pred_fallthru
    _
  %v11 = vld [vmem:[%s0] sm:$0xff]
  %v12 = vld [vmem:[%s0 + $0x8] sm:$0xff]
  %v13 = vld [vmem:[%s0 + $0x10] sm:$0xff]
  %v14 = vld [vmem:[%s0 + $0x18] sm:$0xff]
  %v15 = vld [vmem:[%s0 + $0x20] sm:$0xff]
  %v16 = vld [vmem:[%s0 + $0x28] sm:$0xff]
  %v17 = vld [vmem:[%s0 + $0x30] sm:$0xff]
  %v18 = vld [vmem:[%s0 + $0x38] sm:$0xff]
  %v19 = vld [vmem:[%s0 + $0x40] sm:$0xff]
  %v20 = vld [vmem:[%s0 + $0x48] sm:$0xff]
  %v21 = vld [vmem:[%s0 + $0x50] sm:$0xff]
  %v22 = vld [vmem:[%s0 + $0x58] sm:$0xff]
  %v23 = vld [vmem:[%s0 + $0x60] sm:$0xff]
  %v24 = vld [vmem:[%s0 + $0x68] sm:$0xff]
  %v25 = vld [vmem:[%s0 + $0x70] sm:$0xff]
  %v26 = vld [vmem:[%s0 + $0x78] sm:$0xff]
  %v27 = vld [vmem:[%s0 + $0x80] sm:$0xff]
  %v28 = vld [vmem:[%s0 + $0x88] sm:$0xff]
  %v29 = vld [vmem:[%s0 + $0x90] sm:$0xff]
  %v30 = vld [vmem:[%s0 + $0x98] sm:$0xff]
  %v31 = vld [vmem:[%s0 + $0xa0] sm:$0xff]
  %v32 = vld [vmem:[%s0 + $0xa8] sm:$0xff]
  %v33 = vld [vmem:[%s0 + $0xb0] sm:$0xff]
  %v34 = vld [vmem:[%s0 + $0xb8] sm:$0xff]
  %v35 = vld [vmem:[%s0 + $0xc0] sm:$0xff]
  %v36 = vld [vmem:[%s0 + $0xc8] sm:$0xff]
  %v37 = vld [vmem:[%s0 + $0xd0] sm:$0xff]
  %v38 = vld [vmem:[%s0 + $0xd8] sm:$0xff]
  %v39 = vld [vmem:[%s0 + $0xe0] sm:$0xff]
  %v40 = vld [vmem:[%s0 + $0xe8] sm:$0xff]
  %v41 = vld [vmem:[%s0 + $0xf0] sm:$0xff]
  %v42 = vld [vmem:[%s0 + $0xf8] sm:$0xff]
  %v43 = vld [vmem:[%s0 + $0x100] sm:$0xff]
  %v44 = vld [vmem:[%s0 + $0x108] sm:$0xff]
  %v45 = vld [vmem:[%s0 + $0x110] sm:$0x7]
  %v46 = vld [vmem:[%s1] sm:$0xff]
  %v47 = vld [vmem:[%s1 + $0x8] sm:$0xff]
  %v48 = vld [vmem:[%s1 + $0x10] sm:$0x3]
  %v49 = vld [vmem:[%s1 + $0x18] sm:$0x3]
  %vm50 = vcmask 80896
  %v52 = vsel %vm50, %v11, 0
  %v55 = vsel %vm50, %v12, 0
  %v58 = vsel %vm50, %v13, 0
  %v61 = vsel %vm50, %v14, 0
  %v64 = vsel %vm50, %v15, 0
  %v67 = vsel %vm50, %v16, 0
  %v70 = vsel %vm50, %v17, 0
  %v73 = vsel %vm50, %v18, 0
  %v76 = vsel %vm50, %v19, 0
  %v79 = vsel %vm50, %v20, 0
  %v82 = vsel %vm50, %v21, 0
  %v85 = vsel %vm50, %v22, 0
  %v88 = vsel %vm50, %v23, 0
  %v91 = vsel %vm50, %v24, 0
  %v94 = vsel %vm50, %v25, 0
  %v97 = vsel %vm50, %v26, 0
  %v100 = vsel %vm50, %v27, 0
  %v103 = vsel %vm50, %v28, 0
  %v106 = vsel %vm50, %v29, 0
  %v109 = vsel %vm50, %v30, 0
  %v112 = vsel %vm50, %v31, 0
  %v115 = vsel %vm50, %v32, 0
  %v118 = vsel %vm50, %v33, 0
  %v121 = vsel %vm50, %v34, 0
  %v124 = vsel %vm50, %v35, 0
  %v127 = vsel %vm50, %v36, 0
  %v130 = vsel %vm50, %v37, 0
  %v133 = vsel %vm50, %v38, 0
  %v136 = vsel %vm50, %v39, 0
  %v139 = vsel %vm50, %v40, 0
  %v142 = vsel %vm50, %v41, 0
  %v145 = vsel %vm50, %v42, 0
  %v148 = vsel %vm50, %v43, 0
  %v151 = vsel %vm50, %v44, 0
  %v154 = vsel %vm50, %v45, 0
  %vm156 = vcmask 1041408
  %v158 = vsel %vm156, %v48, 0
  %v161 = vsel %vm156, %v49, 0
  %163 = vmatprep.subr.mxu0 %v47
  %164 = vmatpush1.msra.mxu0 %v46
  %165 = vmatprep.subr.mxu0 %v161
  %166 = vmatpush1.msra.mxu0 %v158
  %167 = vmatprep.subr.mxu0 0.0
  %168 = vmatpush1.msra.mxu0 0.0
  %169 = vmatprep.subr.mxu0 0.0
  %170 = vmatpush1.msra.mxu0 0.0
  %171 = vmatprep.subr.mxu0 0.0
  %172 = vmatpush1.msra.mxu0 0.0
  %173 = vmatprep.subr.mxu0 0.0
  %174 = vmatpush1.msra.mxu0 0.0
  %175 = vmatprep.subr.mxu0 0.0
  %176 = vmatpush1.msra.mxu0 0.0
  %177 = vmatprep.subr.mxu0 0.0
  %178 = vmatpush1.msra.mxu0 0.0
  %179 = vmatprep.subr.mxu0 0.0
  %180 = vmatpush1.msra.mxu0 0.0
  %181 = vmatprep.subr.mxu0 0.0
  %182 = vmatpush1.msra.mxu0 0.0
  %183 = vmatprep.subr.mxu0 0.0
  %184 = vmatpush1.msra.mxu0 0.0
  %185 = vmatprep.subr.mxu0 0.0
  %186 = vmatpush1.msra.mxu0 0.0
  %187 = vmatprep.subr.mxu0 0.0
  %188 = vmatpush1.msra.mxu0 0.0
  %189 = vmatprep.subr.mxu0 0.0
  %190 = vmatpush1.msra.mxu0 0.0
  %191 = vmatprep.subr.mxu0 0.0
  %192 = vmatpush1.msra.mxu0 0.0
  %193 = vmatprep.subr.mxu0 0.0
  %194 = vmatpush1.msra.mxu0 0.0
  %195 = vmatprep.subr.mxu0 0.0
  %196 = vmatpush1.msra.mxu0 0.0
  %197 = vmatprep.subr.mxu0 0.0
  %198 = vmatpush1.msra.mxu0 0.0
  %199 = vmatprep.subr.mxu0 0.0
  %200 = vmatpush1.msra.mxu0 0.0
  %201 = vmatprep.subr.mxu0 0.0
  %202 = vmatpush1.msra.mxu0 0.0
  %203 = vmatprep.subr.mxu0 0.0
  %204 = vmatpush1.msra.mxu0 0.0
  %205 = vmatprep.subr.mxu0 0.0
  %206 = vmatpush1.msra.mxu0 0.0
  %207 = vmatprep.subr.mxu0 0.0
  %208 = vmatpush1.msra.mxu0 0.0
  %209 = vmatprep.subr.mxu0 0.0
  %210 = vmatpush1.msra.mxu0 0.0
  %211 = vmatprep.subr.mxu0 0.0
  %212 = vmatpush1.msra.mxu0 0.0
  %213 = vmatprep.subr.mxu0 0.0
  %214 = vmatpush1.msra.mxu0 0.0
  %215 = vmatprep.subr.mxu0 0.0
  %216 = vmatpush1.msra.mxu0 0.0
  %217 = vmatprep.subr.mxu0 0.0
  %218 = vmatpush1.msra.mxu0 0.0
  %219 = vmatprep.subr.mxu0 0.0
  %220 = vmatpush1.msra.mxu0 0.0
  %221 = vmatprep.subr.mxu0 0.0
  %222 = vmatpush1.msra.mxu0 0.0
  %223 = vmatprep.subr.mxu0 0.0
  %224 = vmatpush1.msra.mxu0 0.0
  %225 = vmatprep.subr.mxu0 0.0
  %226 = vmatpush1.msra.mxu0 0.0
  %227 = vmatprep.mubr.f32.mxu0 0.0
  %228 = vmatmul.mubr.f32.gmra.mrb[0].mxu0 %v52
  %v229 = vpop.f32.mrb[0].mxu0
  %v230 = vadd.f32 0.0, %v229
  %v231 = vpop.f32.mrb[0].mxu0
  %v232 = vadd.f32 0.0, %v231
  %233 = vmatprep.mubr.f32.mxu0 0.0
  %234 = vmatmul.mubr.f32.gmra.mrb[0].mxu0 %v55
  %v235 = vpop.f32.mrb[0].mxu0
  %v236 = vadd.f32 0.0, %v235
  %v237 = vpop.f32.mrb[0].mxu0
  %v238 = vadd.f32 0.0, %v237
  %239 = vmatprep.mubr.f32.mxu0 0.0
  %240 = vmatmul.mubr.f32.gmra.mrb[0].mxu0 %v58
  %v241 = vpop.f32.mrb[0].mxu0
  %v242 = vadd.f32 0.0, %v241
  %v243 = vpop.f32.mrb[0].mxu0
  %v244 = vadd.f32 0.0, %v243
  %245 = vmatprep.mubr.f32.mxu0 0.0
  %246 = vmatmul.mubr.f32.gmra.mrb[0].mxu0 %v61
  %v247 = vpop.f32.mrb[0].mxu0
  %v248 = vadd.f32 0.0, %v247
  %v249 = vpop.f32.mrb[0].mxu0
  %v250 = vadd.f32 0.0, %v249
  %251 = vmatprep.mubr.f32.mxu0 0.0
  %252 = vmatmul.mubr.f32.gmra.mrb[0].mxu0 %v64
  %v253 = vpop.f32.mrb[0].mxu0
  %v254 = vadd.f32 0.0, %v253
  %v255 = vpop.f32.mrb[0].mxu0
  %v256 = vadd.f32 0.0, %v255
  %257 = vmatprep.mubr.f32.mxu0 0.0
  %258 = vmatmul.mubr.f32.gmra.mrb[0].mxu0 %v67
  %v259 = vpop.f32.mrb[0].mxu0
  %v260 = vadd.f32 0.0, %v259
  %v261 = vpop.f32.mrb[0].mxu0
  %v262 = vadd.f32 0.0, %v261
  %263 = vmatprep.mubr.f32.mxu0 0.0
  %264 = vmatmul.mubr.f32.gmra.mrb[0].mxu0 %v70
  %v265 = vpop.f32.mrb[0].mxu0
  %v266 = vadd.f32 0.0, %v265
  %v267 = vpop.f32.mrb[0].mxu0
  %v268 = vadd.f32 0.0, %v267
  %269 = vmatprep.mubr.f32.mxu0 0.0
  %270 = vmatmul.mubr.f32.gmra.mrb[0].mxu0 %v73
  %v271 = vpop.f32.mrb[0].mxu0
  %v272 = vadd.f32 0.0, %v271
  %v273 = vpop.f32.mrb[0].mxu0
  %v274 = vadd.f32 0.0, %v273
  %275 = vmatprep.mubr.f32.mxu0 0.0
  %276 = vmatmul.mubr.f32.gmra.mrb[0].mxu0 %v76
  %v277 = vpop.f32.mrb[0].mxu0
  %v278 = vadd.f32 0.0, %v277
  %v279 = vpop.f32.mrb[0].mxu0
  %v280 = vadd.f32 0.0, %v279
  %281 = vmatprep.mubr.f32.mxu0 0.0
  %282 = vmatmul.mubr.f32.gmra.mrb[0].mxu0 %v79
  %v283 = vpop.f32.mrb[0].mxu0
  %v284 = vadd.f32 0.0, %v283
  %v285 = vpop.f32.mrb[0].mxu0
  %v286 = vadd.f32 0.0, %v285
  %287 = vmatprep.mubr.f32.mxu0 0.0
  %288 = vmatmul.mubr.f32.gmra.mrb[0].mxu0 %v82
  %v289 = vpop.f32.mrb[0].mxu0
  %v290 = vadd.f32 0.0, %v289
  %v291 = vpop.f32.mrb[0].mxu0
  %v292 = vadd.f32 0.0, %v291
  %293 = vmatprep.mubr.f32.mxu0 0.0
  %294 = vmatmul.mubr.f32.gmra.mrb[0].mxu0 %v85
  %v295 = vpop.f32.mrb[0].mxu0
  %v296 = vadd.f32 0.0, %v295
  %v297 = vpop.f32.mrb[0].mxu0
  %v298 = vadd.f32 0.0, %v297
  %299 = vmatprep.mubr.f32.mxu0 0.0
  %300 = vmatmul.mubr.f32.gmra.mrb[0].mxu0 %v88
  %v301 = vpop.f32.mrb[0].mxu0
  %v302 = vadd.f32 0.0, %v301
  %v303 = vpop.f32.mrb[0].mxu0
  %v304 = vadd.f32 0.0, %v303
  %305 = vmatprep.mubr.f32.mxu0 0.0
  %306 = vmatmul.mubr.f32.gmra.mrb[0].mxu0 %v91
  %v307 = vpop.f32.mrb[0].mxu0
  %v308 = vadd.f32 0.0, %v307
  %v309 = vpop.f32.mrb[0].mxu0
  %v310 = vadd.f32 0.0, %v309
  %311 = vmatprep.mubr.f32.mxu0 0.0
  %312 = vmatmul.mubr.f32.gmra.mrb[0].mxu0 %v94
  %v313 = vpop.f32.mrb[0].mxu0
  %v314 = vadd.f32 0.0, %v313
  %v315 = vpop.f32.mrb[0].mxu0
  %v316 = vadd.f32 0.0, %v315
  %317 = vmatprep.mubr.f32.mxu0 0.0
  %318 = vmatmul.mubr.f32.gmra.mrb[0].mxu0 %v97
  %v319 = vpop.f32.mrb[0].mxu0
  %v320 = vadd.f32 0.0, %v319
  %v321 = vpop.f32.mrb[0].mxu0
  %v322 = vadd.f32 0.0, %v321
  %323 = vmatprep.mubr.f32.mxu0 0.0
  %324 = vmatmul.mubr.f32.gmra.mrb[0].mxu0 %v100
  %v325 = vpop.f32.mrb[0].mxu0
  %v326 = vadd.f32 0.0, %v325
  %v327 = vpop.f32.mrb[0].mxu0
  %v328 = vadd.f32 0.0, %v327
  %329 = vmatprep.mubr.f32.mxu0 0.0
  %330 = vmatmul.mubr.f32.gmra.mrb[0].mxu0 %v103
  %v331 = vpop.f32.mrb[0].mxu0
  %v332 = vadd.f32 0.0, %v331
  %v333 = vpop.f32.mrb[0].mxu0
  %v334 = vadd.f32 0.0, %v333
  %335 = vmatprep.mubr.f32.mxu0 0.0
  %336 = vmatmul.mubr.f32.gmra.mrb[0].mxu0 %v106
  %v337 = vpop.f32.mrb[0].mxu0
  %v338 = vadd.f32 0.0, %v337
  %v339 = vpop.f32.mrb[0].mxu0
  %v340 = vadd.f32 0.0, %v339
  %341 = vmatprep.mubr.f32.mxu0 0.0
  %342 = vmatmul.mubr.f32.gmra.mrb[0].mxu0 %v109
  %v343 = vpop.f32.mrb[0].mxu0
  %v344 = vadd.f32 0.0, %v343
  %v345 = vpop.f32.mrb[0].mxu0
  %v346 = vadd.f32 0.0, %v345
  %347 = vmatprep.mubr.f32.mxu0 0.0
  %348 = vmatmul.mubr.f32.gmra.mrb[0].mxu0 %v112
  %v349 = vpop.f32.mrb[0].mxu0
  %v350 = vadd.f32 0.0, %v349
  %v351 = vpop.f32.mrb[0].mxu0
  %v352 = vadd.f32 0.0, %v351
  %353 = vmatprep.mubr.f32.mxu0 0.0
  %354 = vmatmul.mubr.f32.gmra.mrb[0].mxu0 %v115
  %v355 = vpop.f32.mrb[0].mxu0
  %v356 = vadd.f32 0.0, %v355
  %v357 = vpop.f32.mrb[0].mxu0
  %v358 = vadd.f32 0.0, %v357
  %359 = vmatprep.mubr.f32.mxu0 0.0
  %360 = vmatmul.mubr.f32.gmra.mrb[0].mxu0 %v118
  %v361 = vpop.f32.mrb[0].mxu0
  %v362 = vadd.f32 0.0, %v361
  %v363 = vpop.f32.mrb[0].mxu0
  %v364 = vadd.f32 0.0, %v363
  %365 = vmatprep.mubr.f32.mxu0 0.0
  %366 = vmatmul.mubr.f32.gmra.mrb[0].mxu0 %v121
  %v367 = vpop.f32.mrb[0].mxu0
  %v368 = vadd.f32 0.0, %v367
  %v369 = vpop.f32.mrb[0].mxu0
  %v370 = vadd.f32 0.0, %v369
  %371 = vmatprep.mubr.f32.mxu0 0.0
  %372 = vmatmul.mubr.f32.gmra.mrb[0].mxu0 %v124
  %v373 = vpop.f32.mrb[0].mxu0
  %v374 = vadd.f32 0.0, %v373
  %v375 = vpop.f32.mrb[0].mxu0
  %v376 = vadd.f32 0.0, %v375
  %377 = vmatprep.mubr.f32.mxu0 0.0
  %378 = vmatmul.mubr.f32.gmra.mrb[0].mxu0 %v127
  %v379 = vpop.f32.mrb[0].mxu0
  %v380 = vadd.f32 0.0, %v379
  %v381 = vpop.f32.mrb[0].mxu0
  %v382 = vadd.f32 0.0, %v381
  %383 = vmatprep.mubr.f32.mxu0 0.0
  %384 = vmatmul.mubr.f32.gmra.mrb[0].mxu0 %v130
  %v385 = vpop.f32.mrb[0].mxu0
  %v386 = vadd.f32 0.0, %v385
  %v387 = vpop.f32.mrb[0].mxu0
  %v388 = vadd.f32 0.0, %v387
  %389 = vmatprep.mubr.f32.mxu0 0.0
  %390 = vmatmul.mubr.f32.gmra.mrb[0].mxu0 %v133
  %v391 = vpop.f32.mrb[0].mxu0
  %v392 = vadd.f32 0.0, %v391
  %v393 = vpop.f32.mrb[0].mxu0
  %v394 = vadd.f32 0.0, %v393
  %395 = vmatprep.mubr.f32.mxu0 0.0
  %396 = vmatmul.mubr.f32.gmra.mrb[0].mxu0 %v136
  %v397 = vpop.f32.mrb[0].mxu0
  %v398 = vadd.f32 0.0, %v397
  %v399 = vpop.f32.mrb[0].mxu0
  %v400 = vadd.f32 0.0, %v399
  %401 = vmatprep.mubr.f32.mxu0 0.0
  %402 = vmatmul.mubr.f32.gmra.mrb[0].mxu0 %v139
  %v403 = vpop.f32.mrb[0].mxu0
  %v404 = vadd.f32 0.0, %v403
  %v405 = vpop.f32.mrb[0].mxu0
  %v406 = vadd.f32 0.0, %v405
  %407 = vmatprep.mubr.f32.mxu0 0.0
  %408 = vmatmul.mubr.f32.gmra.mrb[0].mxu0 %v142
  %v409 = vpop.f32.mrb[0].mxu0
  %v410 = vadd.f32 0.0, %v409
  %v411 = vpop.f32.mrb[0].mxu0
  %v412 = vadd.f32 0.0, %v411
  %413 = vmatprep.mubr.f32.mxu0 0.0
  %414 = vmatmul.mubr.f32.gmra.mrb[0].mxu0 %v145
  %v415 = vpop.f32.mrb[0].mxu0
  %v416 = vadd.f32 0.0, %v415
  %v417 = vpop.f32.mrb[0].mxu0
  %v418 = vadd.f32 0.0, %v417
  %419 = vmatprep.mubr.f32.mxu0 0.0
  %420 = vmatmul.mubr.f32.gmra.mrb[0].mxu0 %v148
  %v421 = vpop.f32.mrb[0].mxu0
  %v422 = vadd.f32 0.0, %v421
  %v423 = vpop.f32.mrb[0].mxu0
  %v424 = vadd.f32 0.0, %v423
  %425 = vmatprep.mubr.f32.mxu0 0.0
  %426 = vmatmul.mubr.f32.gmra.mrb[0].mxu0 %v151
  %v427 = vpop.f32.mrb[0].mxu0
  %v428 = vadd.f32 0.0, %v427
  %v429 = vpop.f32.mrb[0].mxu0
  %v430 = vadd.f32 0.0, %v429
  %431 = vmatprep.mubr.f32.mxu0 0.0
  %432 = vmatmul.mubr.f32.gmra.mrb[0].mxu0 %v154
  %v433 = vpop.f32.mrb[0].mxu0
  %v434 = vadd.f32 0.0, %v433
  %v435 = vpop.f32.mrb[0].mxu0
  %v436 = vadd.f32 0.0, %v435
  %437 = vdwg.mxu0
  %v438 = vmax.f32 %v230, 0.0
  %v439 = vmax.f32 %v232, 0.0
  %v440 = vmax.f32 %v236, 0.0
  %v441 = vmax.f32 %v238, 0.0
  %v442 = vmax.f32 %v242, 0.0
  %v443 = vmax.f32 %v244, 0.0
  %v444 = vmax.f32 %v248, 0.0
  %v445 = vmax.f32 %v250, 0.0
  %v446 = vmax.f32 %v254, 0.0
  %v447 = vmax.f32 %v256, 0.0
  %v448 = vmax.f32 %v260, 0.0
  %v449 = vmax.f32 %v262, 0.0
  %v450 = vmax.f32 %v266, 0.0
  %v451 = vmax.f32 %v268, 0.0
  %v452 = vmax.f32 %v272, 0.0
  %v453 = vmax.f32 %v274, 0.0
  %v454 = vmax.f32 %v278, 0.0
  %v455 = vmax.f32 %v280, 0.0
  %v456 = vmax.f32 %v284, 0.0
  %v457 = vmax.f32 %v286, 0.0
  %v458 = vmax.f32 %v290, 0.0
  %v459 = vmax.f32 %v292, 0.0
  %v460 = vmax.f32 %v296, 0.0
  %v461 = vmax.f32 %v298, 0.0
  %v462 = vmax.f32 %v302, 0.0
  %v463 = vmax.f32 %v304, 0.0
  %v464 = vmax.f32 %v308, 0.0
  %v465 = vmax.f32 %v310, 0.0
  %v466 = vmax.f32 %v314, 0.0
  %v467 = vmax.f32 %v316, 0.0
  %v468 = vmax.f32 %v320, 0.0
  %v469 = vmax.f32 %v322, 0.0
  %v470 = vmax.f32 %v326, 0.0
  %v471 = vmax.f32 %v328, 0.0
  %v472 = vmax.f32 %v332, 0.0
  %v473 = vmax.f32 %v334, 0.0
  %v474 = vmax.f32 %v338, 0.0
  %v475 = vmax.f32 %v340, 0.0
  %v476 = vmax.f32 %v344, 0.0
  %v477 = vmax.f32 %v346, 0.0
  %v478 = vmax.f32 %v350, 0.0
  %v479 = vmax.f32 %v352, 0.0
  %v480 = vmax.f32 %v356, 0.0
  %v481 = vmax.f32 %v358, 0.0
  %v482 = vmax.f32 %v362, 0.0
  %v483 = vmax.f32 %v364, 0.0
  %v484 = vmax.f32 %v368, 0.0
  %v485 = vmax.f32 %v370, 0.0
  %v486 = vmax.f32 %v374, 0.0
  %v487 = vmax.f32 %v376, 0.0
  %v488 = vmax.f32 %v380, 0.0
  %v489 = vmax.f32 %v382, 0.0
  %v490 = vmax.f32 %v386, 0.0
  %v491 = vmax.f32 %v388, 0.0
  %v492 = vmax.f32 %v392, 0.0
  %v493 = vmax.f32 %v394, 0.0
  %v494 = vmax.f32 %v398, 0.0
  %v495 = vmax.f32 %v400, 0.0
  %v496 = vmax.f32 %v404, 0.0
  %v497 = vmax.f32 %v406, 0.0
  %v498 = vmax.f32 %v410, 0.0
  %v499 = vmax.f32 %v412, 0.0
  %v500 = vmax.f32 %v416, 0.0
  %v501 = vmax.f32 %v418, 0.0
  %v502 = vmax.f32 %v422, 0.0
  %v503 = vmax.f32 %v424, 0.0
  %v504 = vmax.f32 %v428, 0.0
  %v505 = vmax.f32 %v430, 0.0
  %v506 = vmax.f32 %v434, 0.0
  %v507 = vmax.f32 %v436, 0.0
  %v508 = vmin.f32 %v438, 6.0
  %v509 = vmin.f32 %v439, 6.0
  %v510 = vmin.f32 %v440, 6.0
  %v511 = vmin.f32 %v441, 6.0
  %v512 = vmin.f32 %v442, 6.0
  %v513 = vmin.f32 %v443, 6.0
  %v514 = vmin.f32 %v444, 6.0
  %v515 = vmin.f32 %v445, 6.0
  %v516 = vmin.f32 %v446, 6.0
  %v517 = vmin.f32 %v447, 6.0
  %v518 = vmin.f32 %v448, 6.0
  %v519 = vmin.f32 %v449, 6.0
  %v520 = vmin.f32 %v450, 6.0
  %v521 = vmin.f32 %v451, 6.0
  %v522 = vmin.f32 %v452, 6.0
  %v523 = vmin.f32 %v453, 6.0
  %v524 = vmin.f32 %v454, 6.0
  %v525 = vmin.f32 %v455, 6.0
  %v526 = vmin.f32 %v456, 6.0
  %v527 = vmin.f32 %v457, 6.0
  %v528 = vmin.f32 %v458, 6.0
  %v529 = vmin.f32 %v459, 6.0
  %v530 = vmin.f32 %v460, 6.0
  %v531 = vmin.f32 %v461, 6.0
  %v532 = vmin.f32 %v462, 6.0
  %v533 = vmin.f32 %v463, 6.0
  %v534 = vmin.f32 %v464, 6.0
  %v535 = vmin.f32 %v465, 6.0
  %v536 = vmin.f32 %v466, 6.0
  %v537 = vmin.f32 %v467, 6.0
  %v538 = vmin.f32 %v468, 6.0
  %v539 = vmin.f32 %v469, 6.0
  %v540 = vmin.f32 %v470, 6.0
  %v541 = vmin.f32 %v471, 6.0
  %v542 = vmin.f32 %v472, 6.0
  %v543 = vmin.f32 %v473, 6.0
  %v544 = vmin.f32 %v474, 6.0
  %v545 = vmin.f32 %v475, 6.0
  %v546 = vmin.f32 %v476, 6.0
  %v547 = vmin.f32 %v477, 6.0
  %v548 = vmin.f32 %v478, 6.0
  %v549 = vmin.f32 %v479, 6.0
  %v550 = vmin.f32 %v480, 6.0
  %v551 = vmin.f32 %v481, 6.0
  %v552 = vmin.f32 %v482, 6.0
  %v553 = vmin.f32 %v483, 6.0
  %v554 = vmin.f32 %v484, 6.0
  %v555 = vmin.f32 %v485, 6.0
  %v556 = vmin.f32 %v486, 6.0
  %v557 = vmin.f32 %v487, 6.0
  %v558 = vmin.f32 %v488, 6.0
  %v559 = vmin.f32 %v489, 6.0
  %v560 = vmin.f32 %v490, 6.0
  %v561 = vmin.f32 %v491, 6.0
  %v562 = vmin.f32 %v492, 6.0
  %v563 = vmin.f32 %v493, 6.0
  %v564 = vmin.f32 %v494, 6.0
  %v565 = vmin.f32 %v495, 6.0
  %v566 = vmin.f32 %v496, 6.0
  %v567 = vmin.f32 %v497, 6.0
  %v568 = vmin.f32 %v498, 6.0
  %v569 = vmin.f32 %v499, 6.0
  %v570 = vmin.f32 %v500, 6.0
  %v571 = vmin.f32 %v501, 6.0
  %v572 = vmin.f32 %v502, 6.0
  %v573 = vmin.f32 %v503, 6.0
  %v574 = vmin.f32 %v504, 6.0
  %v575 = vmin.f32 %v505, 6.0
  %v576 = vmin.f32 %v506, 6.0
  %v577 = vmin.f32 %v507, 6.0
  %578 = vst [vmem:[%s2] sm:$0xff] %v508
  %579 = vst [vmem:[%s2 + $0x8] sm:$0xff] %v509
  %580 = vst [vmem:[%s2 + $0x10] sm:$0xff] %v510
  %581 = vst [vmem:[%s2 + $0x18] sm:$0xff] %v511
  %582 = vst [vmem:[%s2 + $0x20] sm:$0xff] %v512
  %583 = vst [vmem:[%s2 + $0x28] sm:$0xff] %v513
  %584 = vst [vmem:[%s2 + $0x30] sm:$0xff] %v514
  %585 = vst [vmem:[%s2 + $0x38] sm:$0xff] %v515
  %586 = vst [vmem:[%s2 + $0x40] sm:$0xff] %v516
  %587 = vst [vmem:[%s2 + $0x48] sm:$0xff] %v517
  %588 = vst [vmem:[%s2 + $0x50] sm:$0xff] %v518
  %589 = vst [vmem:[%s2 + $0x58] sm:$0xff] %v519
  %590 = vst [vmem:[%s2 + $0x60] sm:$0xff] %v520
  %591 = vst [vmem:[%s2 + $0x68] sm:$0xff] %v521
  %592 = vst [vmem:[%s2 + $0x70] sm:$0xff] %v522
  %593 = vst [vmem:[%s2 + $0x78] sm:$0xff] %v523
  %594 = vst [vmem:[%s2 + $0x80] sm:$0xff] %v524
  %595 = vst [vmem:[%s2 + $0x88] sm:$0xff] %v525
  %596 = vst [vmem:[%s2 + $0x90] sm:$0xff] %v526
  %597 = vst [vmem:[%s2 + $0x98] sm:$0xff] %v527
  %598 = vst [vmem:[%s2 + $0xa0] sm:$0xff] %v528
  %599 = vst [vmem:[%s2 + $0xa8] sm:$0xff] %v529
  %600 = vst [vmem:[%s2 + $0xb0] sm:$0xff] %v530
  %601 = vst [vmem:[%s2 + $0xb8] sm:$0xff] %v531
  %602 = vst [vmem:[%s2 + $0xc0] sm:$0xff] %v532
  %603 = vst [vmem:[%s2 + $0xc8] sm:$0xff] %v533
  %604 = vst [vmem:[%s2 + $0xd0] sm:$0xff] %v534
  %605 = vst [vmem:[%s2 + $0xd8] sm:$0xff] %v535
  %606 = vst [vmem:[%s2 + $0xe0] sm:$0xff] %v536
  %607 = vst [vmem:[%s2 + $0xe8] sm:$0xff] %v537
  %608 = vst [vmem:[%s2 + $0xf0] sm:$0xff] %v538
  %609 = vst [vmem:[%s2 + $0xf8] sm:$0xff] %v539
  %610 = vst [vmem:[%s2 + $0x100] sm:$0xff] %v540
  %611 = vst [vmem:[%s2 + $0x108] sm:$0xff] %v541
  %612 = vst [vmem:[%s2 + $0x110] sm:$0xff] %v542
  %613 = vst [vmem:[%s2 + $0x118] sm:$0xff] %v543
  %614 = vst [vmem:[%s2 + $0x120] sm:$0xff] %v544
  %615 = vst [vmem:[%s2 + $0x128] sm:$0xff] %v545
  %616 = vst [vmem:[%s2 + $0x130] sm:$0xff] %v546
  %617 = vst [vmem:[%s2 + $0x138] sm:$0xff] %v547
  %618 = vst [vmem:[%s2 + $0x140] sm:$0xff] %v548
  %619 = vst [vmem:[%s2 + $0x148] sm:$0xff] %v549
  %620 = vst [vmem:[%s2 + $0x150] sm:$0xff] %v550
  %621 = vst [vmem:[%s2 + $0x158] sm:$0xff] %v551
  %622 = vst [vmem:[%s2 + $0x160] sm:$0xff] %v552
  %623 = vst [vmem:[%s2 + $0x168] sm:$0xff] %v553
  %624 = vst [vmem:[%s2 + $0x170] sm:$0xff] %v554
  %625 = vst [vmem:[%s2 + $0x178] sm:$0xff] %v555
  %626 = vst [vmem:[%s2 + $0x180] sm:$0xff] %v556
  %627 = vst [vmem:[%s2 + $0x188] sm:$0xff] %v557
  %628 = vst [vmem:[%s2 + $0x190] sm:$0xff] %v558
  %629 = vst [vmem:[%s2 + $0x198] sm:$0xff] %v559
  %630 = vst [vmem:[%s2 + $0x1a0] sm:$0xff] %v560
  %631 = vst [vmem:[%s2 + $0x1a8] sm:$0xff] %v561
  %632 = vst [vmem:[%s2 + $0x1b0] sm:$0xff] %v562
  %633 = vst [vmem:[%s2 + $0x1b8] sm:$0xff] %v563
  %634 = vst [vmem:[%s2 + $0x1c0] sm:$0xff] %v564
  %635 = vst [vmem:[%s2 + $0x1c8] sm:$0xff] %v565
  %636 = vst [vmem:[%s2 + $0x1d0] sm:$0xff] %v566
  %637 = vst [vmem:[%s2 + $0x1d8] sm:$0xff] %v567
  %638 = vst [vmem:[%s2 + $0x1e0] sm:$0xff] %v568
  %639 = vst [vmem:[%s2 + $0x1e8] sm:$0xff] %v569
  %640 = vst [vmem:[%s2 + $0x1f0] sm:$0xff] %v570
  %641 = vst [vmem:[%s2 + $0x1f8] sm:$0xff] %v571
  %642 = vst [vmem:[%s2 + $0x200] sm:$0xff] %v572
  %643 = vst [vmem:[%s2 + $0x208] sm:$0xff] %v573
  %644 = vst [vmem:[%s2 + $0x210] sm:$0xff] %v574
  %645 = vst [vmem:[%s2 + $0x218] sm:$0xff] %v575
  %646 = vst [vmem:[%s2 + $0x220] sm:$0x7] %v576
  %647 = vst [vmem:[%s2 + $0x228] sm:$0x7] %v577
  // Predicated region
  $region10: #{conv_transpose_clamp.1} parent=0 // pred_check
    _
  $region11: #{conv_transpose_clamp.1} parent=0 // pred_check_branch
    %649 = sbr.rel (0) target = $region13
  $region12: #{conv_transpose_clamp.1} parent=0 // pred_region
    _
  $region13: #{conv_transpose_clamp.1} parent=0 // pred_fallthru
    _
  // Predicated region
  $region14: #{conv_transpose_clamp.1} parent=0 // pred_check
    _
  $region15: #{conv_transpose_clamp.1} parent=0 // pred_check_branch
    %651 = sbr.rel (0) target = $region17
  $region16: #{conv_transpose_clamp.1} parent=0 // pred_region
    _
  $region17: #{conv_transpose_clamp.1} parent=0 // pred_fallthru
    _

</llo_original>
